<compile_context>
chip_gen: v6e
topology: v6e:2x2x1
jax: 0.10.0
libtpu: 0.0.40
codegen_flags: <defaults>
</compile_context>

<pallas_src>
import functools

import jax
import jax.numpy as jnp
from jax import lax
from jax.experimental import pallas as pl
from jax.experimental.pallas import tpu as pltpu


def rnn_reg_kernel(x_ref,        # (S*Bp, I)   seq-major input, time/batch collapsed
                   wih0big_ref,  # (I, 2H)     [W_ih0^T | 0]
                   b0big_ref,    # (1, 2H)     [b_ih0+b_hh0 | 0]
                   tailb_ref,    # (1, 2H)     [0 | b_ih1+b_hh1]
                   wbig_ref,     # (2H, 2H)    [[W_hh0^T, W_ih1^T], [0, W_hh1^T]]
                   wreg_ref,     # (2H, Op)    rows[:H]=0, rows[H:, :O]=W_reg^T
                   breg_ref,     # (1, Op)     [b_reg | 0]
                   y_ref,        # (S*Bp, Op)  output (lane-dense)
                   add_sc,       # ((S+1)*Bp, 2H)  per-step additive terms
                   seq_sc,       # ((S+1)*Bp, 2H)  stored [h0_t | h1_{t-1}] sequence
                   *, seq_len, bp, hidden):
    S, Bp, H = seq_len, bp, hidden

    # ---- build the fused per-step additive term with ONE bulk MXU pass ----
    #   add[t] = [x_t @ W_ih0^T + b0 | b1]   for t = 1..S-1
    #   add[0] = [x_0 @ W_ih0^T + b0 | 0 ]   (layer-1 state entering step 1 must be 0)
    #   add[S] = [0                  | b1]   (pipeline-drain step; h0_S is discarded)
    proj = (jnp.dot(x_ref[...], wih0big_ref[...],
                    preferred_element_type=jnp.float32)
            + b0big_ref[...])                        # (S*Bp, 2H), h1-half is all zero
    tailb = tailb_ref[...]                           # (1, 2H) = [0 | b1]
    add_sc[pl.ds(0, Bp), :] = proj[:Bp, :]
    if S > 1:
        add_sc[pl.ds(Bp, (S - 1) * Bp), :] = proj[Bp:, :] + tailb
    add_sc[pl.ds(S * Bp, Bp), :] = jnp.broadcast_to(tailb, (Bp, 2 * H))

    # Recurrent fused weight loaded once, held across the loop.
    wbig = wbig_ref[...]

    # ---- interleaved 2-layer recurrence; hidden state lives in vregs ----
    # carry hcat = [h0_{t-1} | h1_{t-2}]; per step: one (Bp,2H)@(2H,2H) matmul,
    # one add, one tanh. The store into seq_sc is off the serial chain.
    def step(t, hcat):
        row = pl.multiple_of(t * Bp, Bp)             # aligned sublane-tile offset
        hnew = jnp.tanh(
            jnp.dot(hcat, wbig, preferred_element_type=jnp.float32)
            + add_sc[pl.ds(row, Bp), :])             # -> [h0_t | h1_{t-1}]
        seq_sc[pl.ds(row, Bp), :] = hnew             # feeds the bulk head later
        return hnew

    unroll = True if (S + 1) <= 32 else 8            # cap unrolling for long sequences
    lax.fori_loop(0, S + 1, step,
                  jnp.zeros((Bp, 2 * H), jnp.float32), unroll=unroll)

    # ---- lane-dense regression head: ONE (S*Bp, 2H) @ (2H, Op) matmul ----
    # seq_sc row blocks 1..S hold h1_0..h1_{S-1} in their h1 half; wreg_ref has
    # zero rows for the h0 half, so those columns drop out exactly.
    y_ref[...] = (
        jnp.dot(seq_sc[pl.ds(Bp, S * Bp), :], wreg_ref[...],
                preferred_element_type=jnp.float32)
        + breg_ref[...])


def rnn_reg_pallas(x, params):
    """x: (S, B, I) float32 -> (S, B, O) float32."""
    S, B, I = x.shape
    wih0_t, whh0_t, b0, wih1_t, whh1_t, b1, wreg_t, breg = params
    H = whh0_t.shape[0]
    O = wreg_t.shape[1]
    Op = ((O + 127) // 128) * 128                    # lane-dense padded head width

    # Pad batch to a full sublane tile so per-step slices are whole (8, lane)
    # tiles. Padded rows stay independent (contractions are over I/H only).
    Bp = ((B + 7) // 8) * 8
    if Bp != B:
        x = jnp.pad(x, ((0, 0), (0, Bp - B), (0, 0)))
    x2d = x.reshape(S * Bp, I)

    f32 = jnp.float32
    zHH = jnp.zeros((H, H), f32)
    # Fused recurrent weight: [h0 | h1] @ [[Whh0^T, Wih1^T], [0, Whh1^T]]
    wbig = jnp.block([[whh0_t, wih1_t], [zHH, whh1_t]])                    # (2H, 2H)
    # Layer-0 input projection padded to 2H output columns (h1 half = 0)
    wih0big = jnp.concatenate([wih0_t, jnp.zeros((I, H), f32)], axis=1)    # (I, 2H)
    b0big = jnp.concatenate([b0, jnp.zeros((1, H), f32)], axis=1)          # (1, 2H)
    # Layer-1 combined bias placed in the h1 half of the additive term
    tailb = jnp.concatenate([jnp.zeros((1, H), f32), b1], axis=1)          # (1, 2H)
    # Lane-dense head: zero rows for the h0 columns, W_reg^T in the h1 rows
    wregbig = jnp.zeros((2 * H, Op), f32).at[H:, :O].set(wreg_t)           # (2H, Op)
    bregpad = jnp.zeros((1, Op), f32).at[:, :O].set(breg)                  # (1, Op)

    kernel = functools.partial(rnn_reg_kernel, seq_len=S, bp=Bp, hidden=H)
    vspec = pl.BlockSpec(memory_space=pltpu.MemorySpace.VMEM)

    y2d = pl.pallas_call(
        kernel,
        out_shape=jax.ShapeDtypeStruct((S * Bp, Op), f32),
        in_specs=[vspec] * 7,
        out_specs=vspec,
        scratch_shapes=[
            pltpu.VMEM(((S + 1) * Bp, 2 * H), f32),   # fused additive terms
            pltpu.VMEM(((S + 1) * Bp, 2 * H), f32),   # [h0_t | h1_{t-1}] sequence
        ],
    )(x2d, wih0big, b0big, tailb, wbig, wregbig, bregpad)

    return y2d.reshape(S, Bp, Op)[:, :B, :O]


def rnn_reg_ref(x, params):
    """Pure-JAX reference (same semantics as PyTorch rnn_reg forward)."""
    wih0_t, whh0_t, b0, wih1_t, whh1_t, b1, wreg_t, breg = params

    def run_layer(xs, wih_t, whh_t, b):
        B = xs.shape[1]
        H = whh_t.shape[0]

        def step(h, x_t):
            h_new = jnp.tanh(x_t @ wih_t + h @ whh_t + b[0])
            return h_new, h_new

        _, ys = jax.lax.scan(step, jnp.zeros((B, H), jnp.float32), xs)
        return ys

    h = run_layer(x, wih0_t, whh0_t, b0)
    h = run_layer(h, wih1_t, whh1_t, b1)
    return h @ wreg_t + breg[0]


def make_params(key, input_size, hidden_size, output_size):
    """Deterministic init matching PyTorch param shapes (nn.RNN + nn.Linear)."""
    ks = jax.random.split(key, 10)
    scale = 1.0 / jnp.sqrt(hidden_size)
    u = lambda k, shape: jax.random.uniform(k, shape, jnp.float32, -scale, scale)

    # nn.RNN(input_size, hidden_size, num_layers=2), tanh nonlinearity
    w_ih0 = u(ks[0], (hidden_size, input_size))
    w_hh0 = u(ks[1], (hidden_size, hidden_size))
    b_ih0 = u(ks[2], (hidden_size,))
    b_hh0 = u(ks[3], (hidden_size,))
    w_ih1 = u(ks[4], (hidden_size, hidden_size))
    w_hh1 = u(ks[5], (hidden_size, hidden_size))
    b_ih1 = u(ks[6], (hidden_size,))
    b_hh1 = u(ks[7], (hidden_size,))
    # nn.Linear(hidden_size, output_size)
    w_reg = u(ks[8], (output_size, hidden_size))
    b_reg = u(ks[9], (output_size,))

    # Pre-transpose weights / fold RNN biases for the kernel wrapper.
    return (
        w_ih0.T,                                  # (I, H)
        w_hh0.T,                                  # (H, H)
        (b_ih0 + b_hh0).reshape(1, hidden_size),  # (1, H)
        w_ih1.T,                                  # (H, H)
        w_hh1.T,                                  # (H, H)
        (b_ih1 + b_hh1).reshape(1, hidden_size),  # (1, H)
        w_reg.T,                                  # (H, O)
        b_reg.reshape(1, output_size),            # (1, O)
    )


if __name__ == "__main__":
    S, B, I, H, O = 8, 4, 16, 32, 1   # seq, batch, input_size, hidden_size, output_size

    key = jax.random.PRNGKey(0)
    kx, kp = jax.random.split(key)
    x = jax.random.normal(kx, (S, B, I), jnp.float32)
    params = make_params(kp, I, H, O)

    y = rnn_reg_pallas(x, params)
    y = jax.block_until_ready(y)

    y_ref = rnn_reg_ref(x, params)
    assert y.shape == (S, B, O)
    assert jnp.allclose(y, y_ref, atol=1e-4, rtol=1e-4), "mismatch vs reference"

    print("KERNEL_OK")
</pallas_src>

<mosaic_0001>
module attributes {stable_mosaic.version = 11 : i64} {
  func.func @rnn_reg_kernel(%arg0: memref<64x16xf32, #tpu.memory_space<vmem>>, %arg1: memref<16x64xf32, #tpu.memory_space<vmem>>, %arg2: memref<1x64xf32, #tpu.memory_space<vmem>>, %arg3: memref<1x64xf32, #tpu.memory_space<vmem>>, %arg4: memref<64x64xf32, #tpu.memory_space<vmem>>, %arg5: memref<64x128xf32, #tpu.memory_space<vmem>>, %arg6: memref<1x128xf32, #tpu.memory_space<vmem>>, %arg7: memref<64x128xf32, #tpu.memory_space<vmem>>, %arg8: memref<72x64xf32, #tpu.memory_space<vmem>>, %arg9: memref<72x64xf32, #tpu.memory_space<vmem>>) attributes {dimension_semantics = [], scalar_prefetch = 0 : i64, scratch_operands = 2 : i64, tpu.core_type = #tpu.core_type<tc>} {
    %c0 = arith.constant 0 : index
    %c0_0 = arith.constant 0 : index
    %0 = vector.load %arg0[%c0, %c0_0] : memref<64x16xf32, #tpu.memory_space<vmem>>, vector<64x16xf32>
    %c0_1 = arith.constant 0 : index
    %c0_2 = arith.constant 0 : index
    %1 = vector.load %arg1[%c0_1, %c0_2] : memref<16x64xf32, #tpu.memory_space<vmem>>, vector<16x64xf32>
    %cst = arith.constant dense<0.000000e+00> : vector<64x64xf32>
    %2 = tpu.matmul %0, %1, %cst {dimension_numbers = #tpu.dot_dimension_numbers<[1], [0], [0], [1], [0, 0, 1, 1], [], []>} : vector<64x16xf32>, vector<16x64xf32>, vector<64x64xf32> -> vector<64x64xf32>
    %c0_3 = arith.constant 0 : index
    %c0_4 = arith.constant 0 : index
    %3 = vector.load %arg2[%c0_3, %c0_4] : memref<1x64xf32, #tpu.memory_space<vmem>>, vector<1x64xf32>
    %4 = vector.broadcast %3 : vector<1x64xf32> to vector<64x64xf32>
    %5 = arith.addf %2, %4 : vector<64x64xf32>
    %c0_5 = arith.constant 0 : index
    %c0_6 = arith.constant 0 : index
    %6 = vector.load %arg3[%c0_5, %c0_6] : memref<1x64xf32, #tpu.memory_space<vmem>>, vector<1x64xf32>
    %7 = vector.extract_strided_slice %5 {offsets = [0, 0], sizes = [8, 64], strides = [1, 1]} : vector<64x64xf32> to vector<8x64xf32>
    %c0_7 = arith.constant 0 : index
    %c0_8 = arith.constant 0 : index
    %8 = vector.load %arg8[%c0_7, %c0_8] : memref<72x64xf32, #tpu.memory_space<vmem>>, vector<8x64xf32>
    tpu.vector_store %arg8[%c0_7, %c0_8], %7 {strides = array<i32>} : memref<72x64xf32, #tpu.memory_space<vmem>>, vector<8x64xf32>,
    %9 = vector.extract_strided_slice %5 {offsets = [8, 0], sizes = [56, 64], strides = [1, 1]} : vector<64x64xf32> to vector<56x64xf32>
    %10 = vector.broadcast %6 : vector<1x64xf32> to vector<56x64xf32>
    %11 = arith.addf %9, %10 : vector<56x64xf32>
    %c8 = arith.constant 8 : index
    %c0_9 = arith.constant 0 : index
    %12 = vector.load %arg8[%c8, %c0_9] : memref<72x64xf32, #tpu.memory_space<vmem>>, vector<56x64xf32>
    tpu.vector_store %arg8[%c8, %c0_9], %11 {strides = array<i32>} : memref<72x64xf32, #tpu.memory_space<vmem>>, vector<56x64xf32>,
    %13 = vector.shape_cast %6 : vector<1x64xf32> to vector<1x64xf32>
    %14 = vector.broadcast %13 : vector<1x64xf32> to vector<8x64xf32>
    %c64 = arith.constant 64 : index
    %c0_10 = arith.constant 0 : index
    %15 = vector.load %arg8[%c64, %c0_10] : memref<72x64xf32, #tpu.memory_space<vmem>>, vector<8x64xf32>
    tpu.vector_store %arg8[%c64, %c0_10], %14 {strides = array<i32>} : memref<72x64xf32, #tpu.memory_space<vmem>>, vector<8x64xf32>,
    %c0_11 = arith.constant 0 : index
    %c0_12 = arith.constant 0 : index
    %16 = vector.load %arg4[%c0_11, %c0_12] : memref<64x64xf32, #tpu.memory_space<vmem>>, vector<64x64xf32>
    %cst_13 = arith.constant 0.000000e+00 : f32
    %17 = vector.broadcast %cst_13 : f32 to vector<8x64xf32>
    %c0_i32 = arith.constant 0 : i32
    %c8_i32 = arith.constant 8 : i32
    %18 = arith.muli %c0_i32, %c8_i32 : i32
    %19 = tpu.assume_multiple %18, 8 : i32
    %cst_14 = arith.constant dense<0.000000e+00> : vector<8x64xf32>
    %20 = tpu.matmul %17, %16, %cst_14 {dimension_numbers = #tpu.dot_dimension_numbers<[1], [0], [0], [1], [0, 0, 1, 1], [], []>} : vector<8x64xf32>, vector<64x64xf32>, vector<8x64xf32> -> vector<8x64xf32>
    %21 = arith.index_cast %19 : i32 to index
    %c0_15 = arith.constant 0 : index
    %22 = vector.load %arg8[%21, %c0_15] : memref<72x64xf32, #tpu.memory_space<vmem>>, vector<8x64xf32>
    %23 = arith.addf %20, %22 : vector<8x64xf32>
    %24 = math.tanh %23 : vector<8x64xf32>
    %25 = arith.index_cast %19 : i32 to index
    %c0_16 = arith.constant 0 : index
    %26 = vector.load %arg9[%25, %c0_16] : memref<72x64xf32, #tpu.memory_space<vmem>>, vector<8x64xf32>
    tpu.vector_store %arg9[%25, %c0_16], %24 {strides = array<i32>} : memref<72x64xf32, #tpu.memory_space<vmem>>, vector<8x64xf32>,
    %c1_i32 = arith.constant 1 : i32
    %c8_i32_17 = arith.constant 8 : i32
    %27 = arith.muli %c1_i32, %c8_i32_17 : i32
    %28 = tpu.assume_multiple %27, 8 : i32
    %cst_18 = arith.constant dense<0.000000e+00> : vector<8x64xf32>
    %29 = tpu.matmul %24, %16, %cst_18 {dimension_numbers = #tpu.dot_dimension_numbers<[1], [0], [0], [1], [0, 0, 1, 1], [], []>} : vector<8x64xf32>, vector<64x64xf32>, vector<8x64xf32> -> vector<8x64xf32>
    %30 = arith.index_cast %28 : i32 to index
    %c0_19 = arith.constant 0 : index
    %31 = vector.load %arg8[%30, %c0_19] : memref<72x64xf32, #tpu.memory_space<vmem>>, vector<8x64xf32>
    %32 = arith.addf %29, %31 : vector<8x64xf32>
    %33 = math.tanh %32 : vector<8x64xf32>
    %34 = arith.index_cast %28 : i32 to index
    %c0_20 = arith.constant 0 : index
    %35 = vector.load %arg9[%34, %c0_20] : memref<72x64xf32, #tpu.memory_space<vmem>>, vector<8x64xf32>
    tpu.vector_store %arg9[%34, %c0_20], %33 {strides = array<i32>} : memref<72x64xf32, #tpu.memory_space<vmem>>, vector<8x64xf32>,
    %c2_i32 = arith.constant 2 : i32
    %c8_i32_21 = arith.constant 8 : i32
    %36 = arith.muli %c2_i32, %c8_i32_21 : i32
    %37 = tpu.assume_multiple %36, 8 : i32
    %cst_22 = arith.constant dense<0.000000e+00> : vector<8x64xf32>
    %38 = tpu.matmul %33, %16, %cst_22 {dimension_numbers = #tpu.dot_dimension_numbers<[1], [0], [0], [1], [0, 0, 1, 1], [], []>} : vector<8x64xf32>, vector<64x64xf32>, vector<8x64xf32> -> vector<8x64xf32>
    %39 = arith.index_cast %37 : i32 to index
    %c0_23 = arith.constant 0 : index
    %40 = vector.load %arg8[%39, %c0_23] : memref<72x64xf32, #tpu.memory_space<vmem>>, vector<8x64xf32>
    %41 = arith.addf %38, %40 : vector<8x64xf32>
    %42 = math.tanh %41 : vector<8x64xf32>
    %43 = arith.index_cast %37 : i32 to index
    %c0_24 = arith.constant 0 : index
    %44 = vector.load %arg9[%43, %c0_24] : memref<72x64xf32, #tpu.memory_space<vmem>>, vector<8x64xf32>
    tpu.vector_store %arg9[%43, %c0_24], %42 {strides = array<i32>} : memref<72x64xf32, #tpu.memory_space<vmem>>, vector<8x64xf32>,
    %c3_i32 = arith.constant 3 : i32
    %c8_i32_25 = arith.constant 8 : i32
    %45 = arith.muli %c3_i32, %c8_i32_25 : i32
    %46 = tpu.assume_multiple %45, 8 : i32
    %cst_26 = arith.constant dense<0.000000e+00> : vector<8x64xf32>
    %47 = tpu.matmul %42, %16, %cst_26 {dimension_numbers = #tpu.dot_dimension_numbers<[1], [0], [0], [1], [0, 0, 1, 1], [], []>} : vector<8x64xf32>, vector<64x64xf32>, vector<8x64xf32> -> vector<8x64xf32>
    %48 = arith.index_cast %46 : i32 to index
    %c0_27 = arith.constant 0 : index
    %49 = vector.load %arg8[%48, %c0_27] : memref<72x64xf32, #tpu.memory_space<vmem>>, vector<8x64xf32>
    %50 = arith.addf %47, %49 : vector<8x64xf32>
    %51 = math.tanh %50 : vector<8x64xf32>
    %52 = arith.index_cast %46 : i32 to index
    %c0_28 = arith.constant 0 : index
    %53 = vector.load %arg9[%52, %c0_28] : memref<72x64xf32, #tpu.memory_space<vmem>>, vector<8x64xf32>
    tpu.vector_store %arg9[%52, %c0_28], %51 {strides = array<i32>} : memref<72x64xf32, #tpu.memory_space<vmem>>, vector<8x64xf32>,
    %c4_i32 = arith.constant 4 : i32
    %c8_i32_29 = arith.constant 8 : i32
    %54 = arith.muli %c4_i32, %c8_i32_29 : i32
    %55 = tpu.assume_multiple %54, 8 : i32
    %cst_30 = arith.constant dense<0.000000e+00> : vector<8x64xf32>
    %56 = tpu.matmul %51, %16, %cst_30 {dimension_numbers = #tpu.dot_dimension_numbers<[1], [0], [0], [1], [0, 0, 1, 1], [], []>} : vector<8x64xf32>, vector<64x64xf32>, vector<8x64xf32> -> vector<8x64xf32>
    %57 = arith.index_cast %55 : i32 to index
    %c0_31 = arith.constant 0 : index
    %58 = vector.load %arg8[%57, %c0_31] : memref<72x64xf32, #tpu.memory_space<vmem>>, vector<8x64xf32>
    %59 = arith.addf %56, %58 : vector<8x64xf32>
    %60 = math.tanh %59 : vector<8x64xf32>
    %61 = arith.index_cast %55 : i32 to index
    %c0_32 = arith.constant 0 : index
    %62 = vector.load %arg9[%61, %c0_32] : memref<72x64xf32, #tpu.memory_space<vmem>>, vector<8x64xf32>
    tpu.vector_store %arg9[%61, %c0_32], %60 {strides = array<i32>} : memref<72x64xf32, #tpu.memory_space<vmem>>, vector<8x64xf32>,
    %c5_i32 = arith.constant 5 : i32
    %c8_i32_33 = arith.constant 8 : i32
    %63 = arith.muli %c5_i32, %c8_i32_33 : i32
    %64 = tpu.assume_multiple %63, 8 : i32
    %cst_34 = arith.constant dense<0.000000e+00> : vector<8x64xf32>
    %65 = tpu.matmul %60, %16, %cst_34 {dimension_numbers = #tpu.dot_dimension_numbers<[1], [0], [0], [1], [0, 0, 1, 1], [], []>} : vector<8x64xf32>, vector<64x64xf32>, vector<8x64xf32> -> vector<8x64xf32>
    %66 = arith.index_cast %64 : i32 to index
    %c0_35 = arith.constant 0 : index
    %67 = vector.load %arg8[%66, %c0_35] : memref<72x64xf32, #tpu.memory_space<vmem>>, vector<8x64xf32>
    %68 = arith.addf %65, %67 : vector<8x64xf32>
    %69 = math.tanh %68 : vector<8x64xf32>
    %70 = arith.index_cast %64 : i32 to index
    %c0_36 = arith.constant 0 : index
    %71 = vector.load %arg9[%70, %c0_36] : memref<72x64xf32, #tpu.memory_space<vmem>>, vector<8x64xf32>
    tpu.vector_store %arg9[%70, %c0_36], %69 {strides = array<i32>} : memref<72x64xf32, #tpu.memory_space<vmem>>, vector<8x64xf32>,
    %c6_i32 = arith.constant 6 : i32
    %c8_i32_37 = arith.constant 8 : i32
    %72 = arith.muli %c6_i32, %c8_i32_37 : i32
    %73 = tpu.assume_multiple %72, 8 : i32
    %cst_38 = arith.constant dense<0.000000e+00> : vector<8x64xf32>
    %74 = tpu.matmul %69, %16, %cst_38 {dimension_numbers = #tpu.dot_dimension_numbers<[1], [0], [0], [1], [0, 0, 1, 1], [], []>} : vector<8x64xf32>, vector<64x64xf32>, vector<8x64xf32> -> vector<8x64xf32>
    %75 = arith.index_cast %73 : i32 to index
    %c0_39 = arith.constant 0 : index
    %76 = vector.load %arg8[%75, %c0_39] : memref<72x64xf32, #tpu.memory_space<vmem>>, vector<8x64xf32>
    %77 = arith.addf %74, %76 : vector<8x64xf32>
    %78 = math.tanh %77 : vector<8x64xf32>
    %79 = arith.index_cast %73 : i32 to index
    %c0_40 = arith.constant 0 : index
    %80 = vector.load %arg9[%79, %c0_40] : memref<72x64xf32, #tpu.memory_space<vmem>>, vector<8x64xf32>
    tpu.vector_store %arg9[%79, %c0_40], %78 {strides = array<i32>} : memref<72x64xf32, #tpu.memory_space<vmem>>, vector<8x64xf32>,
    %c7_i32 = arith.constant 7 : i32
    %c8_i32_41 = arith.constant 8 : i32
    %81 = arith.muli %c7_i32, %c8_i32_41 : i32
    %82 = tpu.assume_multiple %81, 8 : i32
    %cst_42 = arith.constant dense<0.000000e+00> : vector<8x64xf32>
    %83 = tpu.matmul %78, %16, %cst_42 {dimension_numbers = #tpu.dot_dimension_numbers<[1], [0], [0], [1], [0, 0, 1, 1], [], []>} : vector<8x64xf32>, vector<64x64xf32>, vector<8x64xf32> -> vector<8x64xf32>
    %84 = arith.index_cast %82 : i32 to index
    %c0_43 = arith.constant 0 : index
    %85 = vector.load %arg8[%84, %c0_43] : memref<72x64xf32, #tpu.memory_space<vmem>>, vector<8x64xf32>
    %86 = arith.addf %83, %85 : vector<8x64xf32>
    %87 = math.tanh %86 : vector<8x64xf32>
    %88 = arith.index_cast %82 : i32 to index
    %c0_44 = arith.constant 0 : index
    %89 = vector.load %arg9[%88, %c0_44] : memref<72x64xf32, #tpu.memory_space<vmem>>, vector<8x64xf32>
    tpu.vector_store %arg9[%88, %c0_44], %87 {strides = array<i32>} : memref<72x64xf32, #tpu.memory_space<vmem>>, vector<8x64xf32>,
    %c8_i32_45 = arith.constant 8 : i32
    %c8_i32_46 = arith.constant 8 : i32
    %90 = arith.muli %c8_i32_45, %c8_i32_46 : i32
    %91 = tpu.assume_multiple %90, 8 : i32
    %cst_47 = arith.constant dense<0.000000e+00> : vector<8x64xf32>
    %92 = tpu.matmul %87, %16, %cst_47 {dimension_numbers = #tpu.dot_dimension_numbers<[1], [0], [0], [1], [0, 0, 1, 1], [], []>} : vector<8x64xf32>, vector<64x64xf32>, vector<8x64xf32> -> vector<8x64xf32>
    %93 = arith.index_cast %91 : i32 to index
    %c0_48 = arith.constant 0 : index
    %94 = vector.load %arg8[%93, %c0_48] : memref<72x64xf32, #tpu.memory_space<vmem>>, vector<8x64xf32>
    %95 = arith.addf %92, %94 : vector<8x64xf32>
    %96 = math.tanh %95 : vector<8x64xf32>
    %97 = arith.index_cast %91 : i32 to index
    %c0_49 = arith.constant 0 : index
    %98 = vector.load %arg9[%97, %c0_49] : memref<72x64xf32, #tpu.memory_space<vmem>>, vector<8x64xf32>
    tpu.vector_store %arg9[%97, %c0_49], %96 {strides = array<i32>} : memref<72x64xf32, #tpu.memory_space<vmem>>, vector<8x64xf32>,
    %c9_i32 = arith.constant 9 : i32
    %c8_50 = arith.constant 8 : index
    %c0_51 = arith.constant 0 : index
    %99 = vector.load %arg9[%c8_50, %c0_51] : memref<72x64xf32, #tpu.memory_space<vmem>>, vector<64x64xf32>
    %c0_52 = arith.constant 0 : index
    %c0_53 = arith.constant 0 : index
    %100 = vector.load %arg5[%c0_52, %c0_53] : memref<64x128xf32, #tpu.memory_space<vmem>>, vector<64x128xf32>
    %cst_54 = arith.constant dense<0.000000e+00> : vector<64x128xf32>
    %101 = tpu.matmul %99, %100, %cst_54 {dimension_numbers = #tpu.dot_dimension_numbers<[1], [0], [0], [1], [0, 0, 1, 1], [], []>} : vector<64x64xf32>, vector<64x128xf32>, vector<64x128xf32> -> vector<64x128xf32>
    %c0_55 = arith.constant 0 : index
    %c0_56 = arith.constant 0 : index
    %102 = vector.load %arg6[%c0_55, %c0_56] : memref<1x128xf32, #tpu.memory_space<vmem>>, vector<1x128xf32>
    %103 = vector.broadcast %102 : vector<1x128xf32> to vector<64x128xf32>
    %104 = arith.addf %101, %103 : vector<64x128xf32>
    %c0_57 = arith.constant 0 : index
    %c0_58 = arith.constant 0 : index
    %105 = vector.load %arg7[%c0_57, %c0_58] : memref<64x128xf32, #tpu.memory_space<vmem>>, vector<64x128xf32>
    tpu.vector_store %arg7[%c0_57, %c0_58], %104 {strides = array<i32>} : memref<64x128xf32, #tpu.memory_space<vmem>>, vector<64x128xf32>,
    return
  }
}

</mosaic_0001>

<llo_original>
// kernel: tpu_custom_call.1
$region0: #{tpu_custom_call.1}
  #allocation0 [shape = 'u32[]', space=smem, size = 0x4, offset = 0x4, fixed_abs, tag = 'smem constant byte address 0x4 - core index']
  #allocation1 [shape = 'u32[144,128]{1,0:T(1,128)}', space=vmem, size = 0x12000, scoped, tag = 'internal scratch']
  #allocation2 [shape = 'f32[72,64]{1,0:T(8,128)}', space=vmem, size = 0x9000, scoped, tag = 'scratch operand']
  #allocation3 [shape = 'f32[72,64]{1,0:T(8,128)}', space=vmem, size = 0x9000, scoped, tag = 'scratch operand']
  %s0 = inlined_call_operand.vmem [shape: f32[64,16], index: 0, kind: input, shape index: {}]
  %s1 = inlined_call_operand.vmem [shape: f32[16,64], index: 1, kind: input, shape index: {}]
  %s2 = inlined_call_operand.vmem [shape: f32[1,64], index: 2, kind: input, shape index: {}]
  %s3 = inlined_call_operand.vmem [shape: f32[1,64], index: 3, kind: input, shape index: {}]
  %s4 = inlined_call_operand.vmem [shape: f32[64,64], index: 4, kind: input, shape index: {}]
  %s5 = inlined_call_operand.hbm [shape: f32[64,128], index: 5, kind: input, shape index: {}]
  %s6 = inlined_call_operand.vmem [shape: f32[1,128], index: 6, kind: input, shape index: {}]
  %s7 = inlined_call_operand.hbm [shape: f32[64,128], index: 7, kind: output, shape index: {}]
  %s8 = sld [smem:[#allocation0]]
  $region42: #{tpu_custom_call.1} parent=0
    _
  %s10 = ssub.s32 1, %s8
  %s11 = scalar_select 0, %s10, %s8
  $region1: #{tpu_custom_call.1} parent=0
    #allocation4 [shape = 'u8[32768]{0}', space=vmem, size = 0x8000, scoped, tag = 'input window, operand 5, single buffered']
    #allocation5 [shape = 's32[1]{0}', space=sflag, size = 0x4, scoped, tag = 'scoped memory for tpu_custom_call.1']
    #allocation6 [shape = 's32[1]{0}', space=sflag, size = 0x4, scoped, tag = 'scoped memory for tpu_custom_call.1']
    #allocation7 [shape = 'u8[32768]{0}', space=vmem, size = 0x8000, scoped, tag = 'output window, operand 0, single buffered']
    %12 = vsyncpa [#allocation5], 0
    %13 = vsyncpa [#allocation6], 0
    // Predicated region
    $region2: #{tpu_custom_call.1} parent=1 // pred_check
      _
    $region3: #{tpu_custom_call.1} parent=1 // pred_check_branch
      %15 = sbr.rel (0) target = $region5
    $region4: #{tpu_custom_call.1} parent=1 // pred_region
      _
    $region5: #{tpu_custom_call.1} parent=1 // pred_fallthru
      _
    // Predicated region
    $region6: #{tpu_custom_call.1} parent=1 // pred_check
      _
    $region7: #{tpu_custom_call.1} parent=1 // pred_check_branch
      %17 = sbr.rel (0) target = $region9
    $region8: #{tpu_custom_call.1} parent=1 // pred_region
      _
    $region9: #{tpu_custom_call.1} parent=1 // pred_fallthru
      _
    // Predicated region
    $region10: #{tpu_custom_call.1} parent=1 // pred_check
      _
    $region11: #{tpu_custom_call.1} parent=1 // pred_check_branch
      %19 = sbr.rel (0) target = $region13
    $region12: #{tpu_custom_call.1} parent=1 // pred_region
      _
    $region13: #{tpu_custom_call.1} parent=1 // pred_fallthru
      _
    // Predicated region
    $region14: #{tpu_custom_call.1} parent=1 // pred_check
      _
    $region15: #{tpu_custom_call.1} parent=1 // pred_check_branch
      %21 = sbr.rel (0) target = $region17
    $region16: #{tpu_custom_call.1} parent=1 // pred_region
      _
    $region17: #{tpu_custom_call.1} parent=1 // pred_fallthru
      _
    // Predicated region
    $region18: #{tpu_custom_call.1} parent=1 // pred_check
      _
    $region19: #{tpu_custom_call.1} parent=1 // pred_check_branch
      %23 = sbr.rel (0) target = $region21
    $region20: #{tpu_custom_call.1} parent=1 // pred_region
      _
    $region21: #{tpu_custom_call.1} parent=1 // pred_fallthru
      _
    // Predicated region
    $region22: #{tpu_custom_call.1} parent=1 // pred_check
      _
    $region23: #{tpu_custom_call.1} parent=1 // pred_check_branch
      %25 = sbr.rel (0) target = $region25
    $region24: #{tpu_custom_call.1} parent=1 // pred_region
      %s27 = ssub.s32 1024, 1024
      %28 = vsyncadd [#allocation5], %s27
      %s29 = sshll.u32 [#allocation4], 4
      %s30 = int_to_ptr.vmem [resolvable:$true] %s29
      %35 = dma.hbm_to_vmem [thread:$0]  %s5, 1024, %s30, [#allocation5], 128, 128, 8
    $region25: #{tpu_custom_call.1} parent=1 // pred_fallthru
      _
    // Predicated region
    $region26: #{tpu_custom_call.1} parent=1 // pred_check
      _
    $region27: #{tpu_custom_call.1} parent=1 // pred_check_branch
      %37 = sbr.rel (0) target = $region29
    $region28: #{tpu_custom_call.1} parent=1 // pred_region
      _
    $region29: #{tpu_custom_call.1} parent=1 // pred_fallthru
      _
    // Predicated region
    $region30: #{tpu_custom_call.1} parent=1 // pred_check
      _
    $region31: #{tpu_custom_call.1} parent=1 // pred_check_branch
      %39 = sbr.rel (0) target = $region33
    $region32: #{tpu_custom_call.1} parent=1 // pred_region
      %40 = dma.done [#allocation5], 1024
    $region33: #{tpu_custom_call.1} parent=1 // pred_fallthru
      _
    %v41 = vld [vmem:[%s0] sm:$0xff]
    %v42 = vld [vmem:[%s0 + $0x8] sm:$0xff]
    %v43 = vld [vmem:[%s0 + $0x10] sm:$0xff]
    %v44 = vld [vmem:[%s0 + $0x18] sm:$0xff]
    %v45 = vld [vmem:[%s0 + $0x20] sm:$0xff]
    %v46 = vld [vmem:[%s0 + $0x28] sm:$0xff]
    %v47 = vld [vmem:[%s0 + $0x30] sm:$0xff]
    %v48 = vld [vmem:[%s0 + $0x38] sm:$0xff]
    %v49 = vld [vmem:[%s1] sm:$0xff]
    %v50 = vld [vmem:[%s1 + $0x8] sm:$0xff]
    %v51 = vld [vmem:[%s2] sm:$0x1]
    %v53 = vlaneseq
    %v54 = vshrl.u32 %v53, 7
    %v55 = vsub.s32 0, %v54
    %v56 = vrot.slane %v51, %v55
    %vm58 = vcmask 130048
    %v60 = vsel %vm58, %v41, 0
    %v63 = vsel %vm58, %v42, 0
    %v66 = vsel %vm58, %v43, 0
    %v69 = vsel %vm58, %v44, 0
    %v72 = vsel %vm58, %v45, 0
    %v75 = vsel %vm58, %v46, 0
    %v78 = vsel %vm58, %v47, 0
    %v81 = vsel %vm58, %v48, 0
    %83 = vmatprep.subr.mxu0 0.0
    %84 = vmatpush1.msra.mxu0 0.0
    %85 = vmatprep.subr.mxu0 0.0
    %86 = vmatpush1.msra.mxu0 0.0
    %87 = vmatprep.subr.mxu0 0.0
    %88 = vmatpush1.msra.mxu0 0.0
    %89 = vmatprep.subr.mxu0 0.0
    %90 = vmatpush1.msra.mxu0 0.0
    %91 = vmatprep.subr.mxu0 0.0
    %92 = vmatpush1.msra.mxu0 0.0
    %93 = vmatprep.subr.mxu0 0.0
    %94 = vmatpush1.msra.mxu0 0.0
    %95 = vmatprep.subr.mxu0 0.0
    %96 = vmatpush1.msra.mxu0 0.0
    %97 = vmatprep.subr.mxu0 0.0
    %98 = vmatpush1.msra.mxu0 0.0
    %99 = vmatprep.subr.mxu0 0.0
    %100 = vmatpush1.msra.mxu0 0.0
    %101 = vmatprep.subr.mxu0 0.0
    %102 = vmatpush1.msra.mxu0 0.0
    %103 = vmatprep.subr.mxu0 0.0
    %104 = vmatpush1.msra.mxu0 0.0
    %105 = vmatprep.subr.mxu0 0.0
    %106 = vmatpush1.msra.mxu0 0.0
    %107 = vmatprep.subr.mxu0 0.0
    %108 = vmatpush1.msra.mxu0 0.0
    %109 = vmatprep.subr.mxu0 0.0
    %110 = vmatpush1.msra.mxu0 0.0
    %111 = vmatprep.subr.mxu0 0.0
    %112 = vmatpush1.msra.mxu0 %v50
    %113 = vmatprep.subr.mxu0 0.0
    %114 = vmatpush1.msra.mxu0 %v49
    %115 = vmatprep.subr.mxu0 0.0
    %116 = vmatpush2.msra.mxu0 0.0
    %117 = vmatprep.subr.mxu0 0.0
    %118 = vmatpush2.msra.mxu0 0.0
    %119 = vmatprep.subr.mxu0 0.0
    %120 = vmatpush2.msra.mxu0 0.0
    %121 = vmatprep.subr.mxu0 0.0
    %122 = vmatpush2.msra.mxu0 0.0
    %123 = vmatprep.subr.mxu0 0.0
    %124 = vmatpush2.msra.mxu0 0.0
    %125 = vmatprep.subr.mxu0 0.0
    %126 = vmatpush2.msra.mxu0 0.0
    %127 = vmatprep.subr.mxu0 0.0
    %128 = vmatpush2.msra.mxu0 0.0
    %129 = vmatprep.subr.mxu0 0.0
    %130 = vmatpush2.msra.mxu0 0.0
    %131 = vmatprep.subr.mxu0 0.0
    %132 = vmatpush2.msra.mxu0 0.0
    %133 = vmatprep.subr.mxu0 0.0
    %134 = vmatpush2.msra.mxu0 0.0
    %135 = vmatprep.subr.mxu0 0.0
    %136 = vmatpush2.msra.mxu0 0.0
    %137 = vmatprep.subr.mxu0 0.0
    %138 = vmatpush2.msra.mxu0 0.0
    %139 = vmatprep.subr.mxu0 0.0
    %140 = vmatpush2.msra.mxu0 0.0
    %141 = vmatprep.subr.mxu0 0.0
    %142 = vmatpush2.msra.mxu0 0.0
    %143 = vmatprep.subr.mxu0 0.0
    %144 = vmatpush2.msra.mxu0 0.0
    %145 = vmatprep.subr.mxu0 0.0
    %146 = vmatpush2.msra.mxu0 0.0
    %147 = vmatprep.mubr.f32.mxu0 0.0
    %148 = vmatmul.mubr.f32.gmra.mxu0 %v60
    %v149 = vpop.f32.mrf.mxu0
    %v150 = vadd.f32 %v56, %v149
    %v151 = vpop.f32.mrf.mxu0
    %152 = vmatprep.mubr.f32.mxu0 0.0
    %153 = vmatmul.mubr.f32.gmra.mxu0 %v63
    %v154 = vpop.f32.mrf.mxu0
    %v155 = vadd.f32 %v56, %v154
    %v156 = vpop.f32.mrf.mxu0
    %157 = vmatprep.mubr.f32.mxu0 0.0
    %158 = vmatmul.mubr.f32.gmra.mxu0 %v66
    %v159 = vpop.f32.mrf.mxu0
    %v160 = vadd.f32 %v56, %v159
    %v161 = vpop.f32.mrf.mxu0
    %162 = vmatprep.mubr.f32.mxu0 0.0
    %163 = vmatmul.mubr.f32.gmra.mxu0 %v69
    %v164 = vpop.f32.mrf.mxu0
    %v165 = vadd.f32 %v56, %v164
    %v166 = vpop.f32.mrf.mxu0
    %167 = vmatprep.mubr.f32.mxu0 0.0
    %168 = vmatmul.mubr.f32.gmra.mxu0 %v72
    %v169 = vpop.f32.mrf.mxu0
    %v170 = vadd.f32 %v56, %v169
    %v171 = vpop.f32.mrf.mxu0
    %172 = vmatprep.mubr.f32.mxu0 0.0
    %173 = vmatmul.mubr.f32.gmra.mxu0 %v75
    %v174 = vpop.f32.mrf.mxu0
    %v175 = vadd.f32 %v56, %v174
    %v176 = vpop.f32.mrf.mxu0
    %177 = vmatprep.mubr.f32.mxu0 0.0
    %178 = vmatmul.mubr.f32.gmra.mxu0 %v78
    %v179 = vpop.f32.mrf.mxu0
    %v180 = vadd.f32 %v56, %v179
    %v181 = vpop.f32.mrf.mxu0
    %182 = vmatprep.mubr.f32.mxu0 0.0
    %183 = vmatmul.mubr.f32.gmra.mxu0 %v81
    %v184 = vpop.f32.mrf.mxu0
    %v185 = vadd.f32 %v56, %v184
    %v186 = vpop.f32.mrf.mxu0
    %187 = vdwg.mxu0
    %v188 = vld [vmem:[%s3] sm:$0x1]
    %vm189 = vcmask 523264
    %190 = vst.msk [vmem:[#allocation2] sm:$0xff] %vm189, %v150
    %v192 = vlaneseq
    %v193 = vshrl.u32 %v192, 7
    %v194 = vsub.s32 0, %v193
    %v195 = vrot.slane %v188, %v194
    %v197 = vadd.f32 %v155, %v195
    %v198 = vadd.f32 %v160, %v195
    %v199 = vadd.f32 %v165, %v195
    %v200 = vadd.f32 %v170, %v195
    %v201 = vadd.f32 %v175, %v195
    %v202 = vadd.f32 %v180, %v195
    %v203 = vadd.f32 %v185, %v195
    %204 = vst.msk [vmem:[#allocation2 + $0x8] sm:$0xff] %vm189, %v197
    %205 = vst.msk [vmem:[#allocation2 + $0x10] sm:$0xff] %vm189, %v198
    %206 = vst.msk [vmem:[#allocation2 + $0x18] sm:$0xff] %vm189, %v199
    %207 = vst.msk [vmem:[#allocation2 + $0x20] sm:$0xff] %vm189, %v200
    %208 = vst.msk [vmem:[#allocation2 + $0x28] sm:$0xff] %vm189, %v201
    %209 = vst.msk [vmem:[#allocation2 + $0x30] sm:$0xff] %vm189, %v202
    %210 = vst.msk [vmem:[#allocation2 + $0x38] sm:$0xff] %vm189, %v203
    %211 = vst.msk [vmem:[#allocation2 + $0x40] sm:$0xff] %vm189, %v195
    %v212 = vld [vmem:[%s4] sm:$0xff]
    %v213 = vld [vmem:[%s4 + $0x8] sm:$0xff]
    %v214 = vld [vmem:[%s4 + $0x10] sm:$0xff]
    %v215 = vld [vmem:[%s4 + $0x18] sm:$0xff]
    %v216 = vld [vmem:[%s4 + $0x20] sm:$0xff]
    %v217 = vld [vmem:[%s4 + $0x28] sm:$0xff]
    %v218 = vld [vmem:[%s4 + $0x30] sm:$0xff]
    %v219 = vld [vmem:[%s4 + $0x38] sm:$0xff]
    %v220 = vld [vmem:[#allocation2] sm:$0xff]
    %v222 = vsel %vm189, 0.0, 0
    %224 = vmatprep.subr.mxu0 0.0
    %225 = vmatpush1.msra.mxu0 0.0
    %226 = vmatprep.subr.mxu0 0.0
    %227 = vmatpush1.msra.mxu0 0.0
    %228 = vmatprep.subr.mxu0 0.0
    %229 = vmatpush1.msra.mxu0 0.0
    %230 = vmatprep.subr.mxu0 0.0
    %231 = vmatpush1.msra.mxu0 0.0
    %232 = vmatprep.subr.mxu0 0.0
    %233 = vmatpush1.msra.mxu0 0.0
    %234 = vmatprep.subr.mxu0 0.0
    %235 = vmatpush1.msra.mxu0 0.0
    %236 = vmatprep.subr.mxu0 0.0
    %237 = vmatpush1.msra.mxu0 0.0
    %238 = vmatprep.subr.mxu0 0.0
    %239 = vmatpush1.msra.mxu0 0.0
    %240 = vmatprep.subr.mxu0 0.0
    %241 = vmatpush1.msra.mxu0 %v219
    %242 = vmatprep.subr.mxu0 0.0
    %243 = vmatpush1.msra.mxu0 %v218
    %244 = vmatprep.subr.mxu0 0.0
    %245 = vmatpush1.msra.mxu0 %v217
    %246 = vmatprep.subr.mxu0 0.0
    %247 = vmatpush1.msra.mxu0 %v216
    %248 = vmatprep.subr.mxu0 0.0
    %249 = vmatpush1.msra.mxu0 %v215
    %250 = vmatprep.subr.mxu0 0.0
    %251 = vmatpush1.msra.mxu0 %v214
    %252 = vmatprep.subr.mxu0 0.0
    %253 = vmatpush1.msra.mxu0 %v213
    %254 = vmatprep.subr.mxu0 0.0
    %255 = vmatpush1.msra.mxu0 %v212
    %256 = vmatprep.subr.mxu0 0.0
    %257 = vmatpush2.msra.mxu0 0.0
    %258 = vmatprep.subr.mxu0 0.0
    %259 = vmatpush2.msra.mxu0 0.0
    %260 = vmatprep.subr.mxu0 0.0
    %261 = vmatpush2.msra.mxu0 0.0
    %262 = vmatprep.subr.mxu0 0.0
    %263 = vmatpush2.msra.mxu0 0.0
    %264 = vmatprep.subr.mxu0 0.0
    %265 = vmatpush2.msra.mxu0 0.0
    %266 = vmatprep.subr.mxu0 0.0
    %267 = vmatpush2.msra.mxu0 0.0
    %268 = vmatprep.subr.mxu0 0.0
    %269 = vmatpush2.msra.mxu0 0.0
    %270 = vmatprep.subr.mxu0 0.0
    %271 = vmatpush2.msra.mxu0 0.0
    %272 = vmatprep.subr.mxu0 0.0
    %273 = vmatpush2.msra.mxu0 0.0
    %274 = vmatprep.subr.mxu0 0.0
    %275 = vmatpush2.msra.mxu0 0.0
    %276 = vmatprep.subr.mxu0 0.0
    %277 = vmatpush2.msra.mxu0 0.0
    %278 = vmatprep.subr.mxu0 0.0
    %279 = vmatpush2.msra.mxu0 0.0
    %280 = vmatprep.subr.mxu0 0.0
    %281 = vmatpush2.msra.mxu0 0.0
    %282 = vmatprep.subr.mxu0 0.0
    %283 = vmatpush2.msra.mxu0 0.0
    %284 = vmatprep.subr.mxu0 0.0
    %285 = vmatpush2.msra.mxu0 0.0
    %286 = vmatprep.subr.mxu0 0.0
    %287 = vmatpush2.msra.mxu0 0.0
    %288 = vmatprep.mubr.f32.mxu0 0.0
    %289 = vmatmul.mubr.f32.gmra.mxu0 %v222
    %v290 = vpop.f32.mrf.mxu0
    %v291 = vadd.f32 %v220, %v290
    %v292 = vpop.f32.mrf.mxu0
    %293 = vdwg.mxu0
    %v294 = vtanh.pop %v291
    %295 = vst.msk [vmem:[#allocation3] sm:$0xff] %vm189, %v294
    %s296 = scalar_lea.vmem [#allocation2], 8
    %v297 = vld [vmem:[%s296] sm:$0xff]
    %v299 = vsel %vm189, %v294, 0
    %301 = vmatprep.subr.mxu0 0.0
    %302 = vmatpush1.msra.mxu0 0.0
    %303 = vmatprep.subr.mxu0 0.0
    %304 = vmatpush1.msra.mxu0 0.0
    %305 = vmatprep.subr.mxu0 0.0
    %306 = vmatpush1.msra.mxu0 0.0
    %307 = vmatprep.subr.mxu0 0.0
    %308 = vmatpush1.msra.mxu0 0.0
    %309 = vmatprep.subr.mxu0 0.0
    %310 = vmatpush1.msra.mxu0 0.0
    %311 = vmatprep.subr.mxu0 0.0
    %312 = vmatpush1.msra.mxu0 0.0
    %313 = vmatprep.subr.mxu0 0.0
    %314 = vmatpush1.msra.mxu0 0.0
    %315 = vmatprep.subr.mxu0 0.0
    %316 = vmatpush1.msra.mxu0 0.0
    %317 = vmatprep.subr.mxu0 0.0
    %318 = vmatpush1.msra.mxu0 %v219
    %319 = vmatprep.subr.mxu0 0.0
    %320 = vmatpush1.msra.mxu0 %v218
    %321 = vmatprep.subr.mxu0 0.0
    %322 = vmatpush1.msra.mxu0 %v217
    %323 = vmatprep.subr.mxu0 0.0
    %324 = vmatpush1.msra.mxu0 %v216
    %325 = vmatprep.subr.mxu0 0.0
    %326 = vmatpush1.msra.mxu0 %v215
    %327 = vmatprep.subr.mxu0 0.0
    %328 = vmatpush1.msra.mxu0 %v214
    %329 = vmatprep.subr.mxu0 0.0
    %330 = vmatpush1.msra.mxu0 %v213
    %331 = vmatprep.subr.mxu0 0.0
    %332 = vmatpush1.msra.mxu0 %v212
    %333 = vmatprep.subr.mxu0 0.0
    %334 = vmatpush2.msra.mxu0 0.0
    %335 = vmatprep.subr.mxu0 0.0
    %336 = vmatpush2.msra.mxu0 0.0
    %337 = vmatprep.subr.mxu0 0.0
    %338 = vmatpush2.msra.mxu0 0.0
    %339 = vmatprep.subr.mxu0 0.0
    %340 = vmatpush2.msra.mxu0 0.0
    %341 = vmatprep.subr.mxu0 0.0
    %342 = vmatpush2.msra.mxu0 0.0
    %343 = vmatprep.subr.mxu0 0.0
    %344 = vmatpush2.msra.mxu0 0.0
    %345 = vmatprep.subr.mxu0 0.0
    %346 = vmatpush2.msra.mxu0 0.0
    %347 = vmatprep.subr.mxu0 0.0
    %348 = vmatpush2.msra.mxu0 0.0
    %349 = vmatprep.subr.mxu0 0.0
    %350 = vmatpush2.msra.mxu0 0.0
    %351 = vmatprep.subr.mxu0 0.0
    %352 = vmatpush2.msra.mxu0 0.0
    %353 = vmatprep.subr.mxu0 0.0
    %354 = vmatpush2.msra.mxu0 0.0
    %355 = vmatprep.subr.mxu0 0.0
    %356 = vmatpush2.msra.mxu0 0.0
    %357 = vmatprep.subr.mxu0 0.0
    %358 = vmatpush2.msra.mxu0 0.0
    %359 = vmatprep.subr.mxu0 0.0
    %360 = vmatpush2.msra.mxu0 0.0
    %361 = vmatprep.subr.mxu0 0.0
    %362 = vmatpush2.msra.mxu0 0.0
    %363 = vmatprep.subr.mxu0 0.0
    %364 = vmatpush2.msra.mxu0 0.0
    %365 = vmatprep.mubr.f32.mxu0 0.0
    %366 = vmatmul.mubr.f32.gmra.mxu0 %v299
    %v367 = vpop.f32.mrf.mxu0
    %v368 = vadd.f32 %v297, %v367
    %v369 = vpop.f32.mrf.mxu0
    %370 = vdwg.mxu0
    %v371 = vtanh.pop %v368
    %s372 = scalar_lea.vmem [#allocation3], 8
    %373 = vst.msk [vmem:[%s372] sm:$0xff] %vm189, %v371
    %s374 = scalar_lea.vmem [#allocation2], 16
    %v375 = vld [vmem:[%s374] sm:$0xff]
    %v377 = vsel %vm189, %v371, 0
    %379 = vmatprep.subr.mxu0 0.0
    %380 = vmatpush1.msra.mxu0 0.0
    %381 = vmatprep.subr.mxu0 0.0
    %382 = vmatpush1.msra.mxu0 0.0
    %383 = vmatprep.subr.mxu0 0.0
    %384 = vmatpush1.msra.mxu0 0.0
    %385 = vmatprep.subr.mxu0 0.0
    %386 = vmatpush1.msra.mxu0 0.0
    %387 = vmatprep.subr.mxu0 0.0
    %388 = vmatpush1.msra.mxu0 0.0
    %389 = vmatprep.subr.mxu0 0.0
    %390 = vmatpush1.msra.mxu0 0.0
    %391 = vmatprep.subr.mxu0 0.0
    %392 = vmatpush1.msra.mxu0 0.0
    %393 = vmatprep.subr.mxu0 0.0
    %394 = vmatpush1.msra.mxu0 0.0
    %395 = vmatprep.subr.mxu0 0.0
    %396 = vmatpush1.msra.mxu0 %v219
    %397 = vmatprep.subr.mxu0 0.0
    %398 = vmatpush1.msra.mxu0 %v218
    %399 = vmatprep.subr.mxu0 0.0
    %400 = vmatpush1.msra.mxu0 %v217
    %401 = vmatprep.subr.mxu0 0.0
    %402 = vmatpush1.msra.mxu0 %v216
    %403 = vmatprep.subr.mxu0 0.0
    %404 = vmatpush1.msra.mxu0 %v215
    %405 = vmatprep.subr.mxu0 0.0
    %406 = vmatpush1.msra.mxu0 %v214
    %407 = vmatprep.subr.mxu0 0.0
    %408 = vmatpush1.msra.mxu0 %v213
    %409 = vmatprep.subr.mxu0 0.0
    %410 = vmatpush1.msra.mxu0 %v212
    %411 = vmatprep.subr.mxu0 0.0
    %412 = vmatpush2.msra.mxu0 0.0
    %413 = vmatprep.subr.mxu0 0.0
    %414 = vmatpush2.msra.mxu0 0.0
    %415 = vmatprep.subr.mxu0 0.0
    %416 = vmatpush2.msra.mxu0 0.0
    %417 = vmatprep.subr.mxu0 0.0
    %418 = vmatpush2.msra.mxu0 0.0
    %419 = vmatprep.subr.mxu0 0.0
    %420 = vmatpush2.msra.mxu0 0.0
    %421 = vmatprep.subr.mxu0 0.0
    %422 = vmatpush2.msra.mxu0 0.0
    %423 = vmatprep.subr.mxu0 0.0
    %424 = vmatpush2.msra.mxu0 0.0
    %425 = vmatprep.subr.mxu0 0.0
    %426 = vmatpush2.msra.mxu0 0.0
    %427 = vmatprep.subr.mxu0 0.0
    %428 = vmatpush2.msra.mxu0 0.0
    %429 = vmatprep.subr.mxu0 0.0
    %430 = vmatpush2.msra.mxu0 0.0
    %431 = vmatprep.subr.mxu0 0.0
    %432 = vmatpush2.msra.mxu0 0.0
    %433 = vmatprep.subr.mxu0 0.0
    %434 = vmatpush2.msra.mxu0 0.0
    %435 = vmatprep.subr.mxu0 0.0
    %436 = vmatpush2.msra.mxu0 0.0
    %437 = vmatprep.subr.mxu0 0.0
    %438 = vmatpush2.msra.mxu0 0.0
    %439 = vmatprep.subr.mxu0 0.0
    %440 = vmatpush2.msra.mxu0 0.0
    %441 = vmatprep.subr.mxu0 0.0
    %442 = vmatpush2.msra.mxu0 0.0
    %443 = vmatprep.mubr.f32.mxu0 0.0
    %444 = vmatmul.mubr.f32.gmra.mxu0 %v377
    %v445 = vpop.f32.mrf.mxu0
    %v446 = vadd.f32 %v375, %v445
    %v447 = vpop.f32.mrf.mxu0
    %448 = vdwg.mxu0
    %v449 = vtanh.pop %v446
    %s450 = scalar_lea.vmem [#allocation3], 16
    %451 = vst.msk [vmem:[%s450] sm:$0xff] %vm189, %v449
    %s452 = scalar_lea.vmem [#allocation2], 24
    %v453 = vld [vmem:[%s452] sm:$0xff]
    %v455 = vsel %vm189, %v449, 0
    %457 = vmatprep.subr.mxu0 0.0
    %458 = vmatpush1.msra.mxu0 0.0
    %459 = vmatprep.subr.mxu0 0.0
    %460 = vmatpush1.msra.mxu0 0.0
    %461 = vmatprep.subr.mxu0 0.0
    %462 = vmatpush1.msra.mxu0 0.0
    %463 = vmatprep.subr.mxu0 0.0
    %464 = vmatpush1.msra.mxu0 0.0
    %465 = vmatprep.subr.mxu0 0.0
    %466 = vmatpush1.msra.mxu0 0.0
    %467 = vmatprep.subr.mxu0 0.0
    %468 = vmatpush1.msra.mxu0 0.0
    %469 = vmatprep.subr.mxu0 0.0
    %470 = vmatpush1.msra.mxu0 0.0
    %471 = vmatprep.subr.mxu0 0.0
    %472 = vmatpush1.msra.mxu0 0.0
    %473 = vmatprep.subr.mxu0 0.0
    %474 = vmatpush1.msra.mxu0 %v219
    %475 = vmatprep.subr.mxu0 0.0
    %476 = vmatpush1.msra.mxu0 %v218
    %477 = vmatprep.subr.mxu0 0.0
    %478 = vmatpush1.msra.mxu0 %v217
    %479 = vmatprep.subr.mxu0 0.0
    %480 = vmatpush1.msra.mxu0 %v216
    %481 = vmatprep.subr.mxu0 0.0
    %482 = vmatpush1.msra.mxu0 %v215
    %483 = vmatprep.subr.mxu0 0.0
    %484 = vmatpush1.msra.mxu0 %v214
    %485 = vmatprep.subr.mxu0 0.0
    %486 = vmatpush1.msra.mxu0 %v213
    %487 = vmatprep.subr.mxu0 0.0
    %488 = vmatpush1.msra.mxu0 %v212
    %489 = vmatprep.subr.mxu0 0.0
    %490 = vmatpush2.msra.mxu0 0.0
    %491 = vmatprep.subr.mxu0 0.0
    %492 = vmatpush2.msra.mxu0 0.0
    %493 = vmatprep.subr.mxu0 0.0
    %494 = vmatpush2.msra.mxu0 0.0
    %495 = vmatprep.subr.mxu0 0.0
    %496 = vmatpush2.msra.mxu0 0.0
    %497 = vmatprep.subr.mxu0 0.0
    %498 = vmatpush2.msra.mxu0 0.0
    %499 = vmatprep.subr.mxu0 0.0
    %500 = vmatpush2.msra.mxu0 0.0
    %501 = vmatprep.subr.mxu0 0.0
    %502 = vmatpush2.msra.mxu0 0.0
    %503 = vmatprep.subr.mxu0 0.0
    %504 = vmatpush2.msra.mxu0 0.0
    %505 = vmatprep.subr.mxu0 0.0
    %506 = vmatpush2.msra.mxu0 0.0
    %507 = vmatprep.subr.mxu0 0.0
    %508 = vmatpush2.msra.mxu0 0.0
    %509 = vmatprep.subr.mxu0 0.0
    %510 = vmatpush2.msra.mxu0 0.0
    %511 = vmatprep.subr.mxu0 0.0
    %512 = vmatpush2.msra.mxu0 0.0
    %513 = vmatprep.subr.mxu0 0.0
    %514 = vmatpush2.msra.mxu0 0.0
    %515 = vmatprep.subr.mxu0 0.0
    %516 = vmatpush2.msra.mxu0 0.0
    %517 = vmatprep.subr.mxu0 0.0
    %518 = vmatpush2.msra.mxu0 0.0
    %519 = vmatprep.subr.mxu0 0.0
    %520 = vmatpush2.msra.mxu0 0.0
    %521 = vmatprep.mubr.f32.mxu0 0.0
    %522 = vmatmul.mubr.f32.gmra.mxu0 %v455
    %v523 = vpop.f32.mrf.mxu0
    %v524 = vadd.f32 %v453, %v523
    %v525 = vpop.f32.mrf.mxu0
    %526 = vdwg.mxu0
    %v527 = vtanh.pop %v524
    %s528 = scalar_lea.vmem [#allocation3], 24
    %529 = vst.msk [vmem:[%s528] sm:$0xff] %vm189, %v527
    %s530 = scalar_lea.vmem [#allocation2], 32
    %v531 = vld [vmem:[%s530] sm:$0xff]
    %v533 = vsel %vm189, %v527, 0
    %535 = vmatprep.subr.mxu0 0.0
    %536 = vmatpush1.msra.mxu0 0.0
    %537 = vmatprep.subr.mxu0 0.0
    %538 = vmatpush1.msra.mxu0 0.0
    %539 = vmatprep.subr.mxu0 0.0
    %540 = vmatpush1.msra.mxu0 0.0
    %541 = vmatprep.subr.mxu0 0.0
    %542 = vmatpush1.msra.mxu0 0.0
    %543 = vmatprep.subr.mxu0 0.0
    %544 = vmatpush1.msra.mxu0 0.0
    %545 = vmatprep.subr.mxu0 0.0
    %546 = vmatpush1.msra.mxu0 0.0
    %547 = vmatprep.subr.mxu0 0.0
    %548 = vmatpush1.msra.mxu0 0.0
    %549 = vmatprep.subr.mxu0 0.0
    %550 = vmatpush1.msra.mxu0 0.0
    %551 = vmatprep.subr.mxu0 0.0
    %552 = vmatpush1.msra.mxu0 %v219
    %553 = vmatprep.subr.mxu0 0.0
    %554 = vmatpush1.msra.mxu0 %v218
    %555 = vmatprep.subr.mxu0 0.0
    %556 = vmatpush1.msra.mxu0 %v217
    %557 = vmatprep.subr.mxu0 0.0
    %558 = vmatpush1.msra.mxu0 %v216
    %559 = vmatprep.subr.mxu0 0.0
    %560 = vmatpush1.msra.mxu0 %v215
    %561 = vmatprep.subr.mxu0 0.0
    %562 = vmatpush1.msra.mxu0 %v214
    %563 = vmatprep.subr.mxu0 0.0
    %564 = vmatpush1.msra.mxu0 %v213
    %565 = vmatprep.subr.mxu0 0.0
    %566 = vmatpush1.msra.mxu0 %v212
    %567 = vmatprep.subr.mxu0 0.0
    %568 = vmatpush2.msra.mxu0 0.0
    %569 = vmatprep.subr.mxu0 0.0
    %570 = vmatpush2.msra.mxu0 0.0
    %571 = vmatprep.subr.mxu0 0.0
    %572 = vmatpush2.msra.mxu0 0.0
    %573 = vmatprep.subr.mxu0 0.0
    %574 = vmatpush2.msra.mxu0 0.0
    %575 = vmatprep.subr.mxu0 0.0
    %576 = vmatpush2.msra.mxu0 0.0
    %577 = vmatprep.subr.mxu0 0.0
    %578 = vmatpush2.msra.mxu0 0.0
    %579 = vmatprep.subr.mxu0 0.0
    %580 = vmatpush2.msra.mxu0 0.0
    %581 = vmatprep.subr.mxu0 0.0
    %582 = vmatpush2.msra.mxu0 0.0
    %583 = vmatprep.subr.mxu0 0.0
    %584 = vmatpush2.msra.mxu0 0.0
    %585 = vmatprep.subr.mxu0 0.0
    %586 = vmatpush2.msra.mxu0 0.0
    %587 = vmatprep.subr.mxu0 0.0
    %588 = vmatpush2.msra.mxu0 0.0
    %589 = vmatprep.subr.mxu0 0.0
    %590 = vmatpush2.msra.mxu0 0.0
    %591 = vmatprep.subr.mxu0 0.0
    %592 = vmatpush2.msra.mxu0 0.0
    %593 = vmatprep.subr.mxu0 0.0
    %594 = vmatpush2.msra.mxu0 0.0
    %595 = vmatprep.subr.mxu0 0.0
    %596 = vmatpush2.msra.mxu0 0.0
    %597 = vmatprep.subr.mxu0 0.0
    %598 = vmatpush2.msra.mxu0 0.0
    %599 = vmatprep.mubr.f32.mxu0 0.0
    %600 = vmatmul.mubr.f32.gmra.mxu0 %v533
    %v601 = vpop.f32.mrf.mxu0
    %v602 = vadd.f32 %v531, %v601
    %v603 = vpop.f32.mrf.mxu0
    %604 = vdwg.mxu0
    %v605 = vtanh.pop %v602
    %s606 = scalar_lea.vmem [#allocation3], 32
    %607 = vst.msk [vmem:[%s606] sm:$0xff] %vm189, %v605
    %s608 = scalar_lea.vmem [#allocation2], 40
    %v609 = vld [vmem:[%s608] sm:$0xff]
    %v611 = vsel %vm189, %v605, 0
    %613 = vmatprep.subr.mxu0 0.0
    %614 = vmatpush1.msra.mxu0 0.0
    %615 = vmatprep.subr.mxu0 0.0
    %616 = vmatpush1.msra.mxu0 0.0
    %617 = vmatprep.subr.mxu0 0.0
    %618 = vmatpush1.msra.mxu0 0.0
    %619 = vmatprep.subr.mxu0 0.0
    %620 = vmatpush1.msra.mxu0 0.0
    %621 = vmatprep.subr.mxu0 0.0
    %622 = vmatpush1.msra.mxu0 0.0
    %623 = vmatprep.subr.mxu0 0.0
    %624 = vmatpush1.msra.mxu0 0.0
    %625 = vmatprep.subr.mxu0 0.0
    %626 = vmatpush1.msra.mxu0 0.0
    %627 = vmatprep.subr.mxu0 0.0
    %628 = vmatpush1.msra.mxu0 0.0
    %629 = vmatprep.subr.mxu0 0.0
    %630 = vmatpush1.msra.mxu0 %v219
    %631 = vmatprep.subr.mxu0 0.0
    %632 = vmatpush1.msra.mxu0 %v218
    %633 = vmatprep.subr.mxu0 0.0
    %634 = vmatpush1.msra.mxu0 %v217
    %635 = vmatprep.subr.mxu0 0.0
    %636 = vmatpush1.msra.mxu0 %v216
    %637 = vmatprep.subr.mxu0 0.0
    %638 = vmatpush1.msra.mxu0 %v215
    %639 = vmatprep.subr.mxu0 0.0
    %640 = vmatpush1.msra.mxu0 %v214
    %641 = vmatprep.subr.mxu0 0.0
    %642 = vmatpush1.msra.mxu0 %v213
    %643 = vmatprep.subr.mxu0 0.0
    %644 = vmatpush1.msra.mxu0 %v212
    %645 = vmatprep.subr.mxu0 0.0
    %646 = vmatpush2.msra.mxu0 0.0
    %647 = vmatprep.subr.mxu0 0.0
    %648 = vmatpush2.msra.mxu0 0.0
    %649 = vmatprep.subr.mxu0 0.0
    %650 = vmatpush2.msra.mxu0 0.0
    %651 = vmatprep.subr.mxu0 0.0
    %652 = vmatpush2.msra.mxu0 0.0
    %653 = vmatprep.subr.mxu0 0.0
    %654 = vmatpush2.msra.mxu0 0.0
    %655 = vmatprep.subr.mxu0 0.0
    %656 = vmatpush2.msra.mxu0 0.0
    %657 = vmatprep.subr.mxu0 0.0
    %658 = vmatpush2.msra.mxu0 0.0
    %659 = vmatprep.subr.mxu0 0.0
    %660 = vmatpush2.msra.mxu0 0.0
    %661 = vmatprep.subr.mxu0 0.0
    %662 = vmatpush2.msra.mxu0 0.0
    %663 = vmatprep.subr.mxu0 0.0
    %664 = vmatpush2.msra.mxu0 0.0
    %665 = vmatprep.subr.mxu0 0.0
    %666 = vmatpush2.msra.mxu0 0.0
    %667 = vmatprep.subr.mxu0 0.0
    %668 = vmatpush2.msra.mxu0 0.0
    %669 = vmatprep.subr.mxu0 0.0
    %670 = vmatpush2.msra.mxu0 0.0
    %671 = vmatprep.subr.mxu0 0.0
    %672 = vmatpush2.msra.mxu0 0.0
    %673 = vmatprep.subr.mxu0 0.0
    %674 = vmatpush2.msra.mxu0 0.0
    %675 = vmatprep.subr.mxu0 0.0
    %676 = vmatpush2.msra.mxu0 0.0
    %677 = vmatprep.mubr.f32.mxu0 0.0
    %678 = vmatmul.mubr.f32.gmra.mxu0 %v611
    %v679 = vpop.f32.mrf.mxu0
    %v680 = vadd.f32 %v609, %v679
    %v681 = vpop.f32.mrf.mxu0
    %682 = vdwg.mxu0
    %v683 = vtanh.pop %v680
    %s684 = scalar_lea.vmem [#allocation3], 40
    %685 = vst.msk [vmem:[%s684] sm:$0xff] %vm189, %v683
    %s686 = scalar_lea.vmem [#allocation2], 48
    %v687 = vld [vmem:[%s686] sm:$0xff]
    %v689 = vsel %vm189, %v683, 0
    %691 = vmatprep.subr.mxu0 0.0
    %692 = vmatpush1.msra.mxu0 0.0
    %693 = vmatprep.subr.mxu0 0.0
    %694 = vmatpush1.msra.mxu0 0.0
    %695 = vmatprep.subr.mxu0 0.0
    %696 = vmatpush1.msra.mxu0 0.0
    %697 = vmatprep.subr.mxu0 0.0
    %698 = vmatpush1.msra.mxu0 0.0
    %699 = vmatprep.subr.mxu0 0.0
    %700 = vmatpush1.msra.mxu0 0.0
    %701 = vmatprep.subr.mxu0 0.0
    %702 = vmatpush1.msra.mxu0 0.0
    %703 = vmatprep.subr.mxu0 0.0
    %704 = vmatpush1.msra.mxu0 0.0
    %705 = vmatprep.subr.mxu0 0.0
    %706 = vmatpush1.msra.mxu0 0.0
    %707 = vmatprep.subr.mxu0 0.0
    %708 = vmatpush1.msra.mxu0 %v219
    %709 = vmatprep.subr.mxu0 0.0
    %710 = vmatpush1.msra.mxu0 %v218
    %711 = vmatprep.subr.mxu0 0.0
    %712 = vmatpush1.msra.mxu0 %v217
    %713 = vmatprep.subr.mxu0 0.0
    %714 = vmatpush1.msra.mxu0 %v216
    %715 = vmatprep.subr.mxu0 0.0
    %716 = vmatpush1.msra.mxu0 %v215
    %717 = vmatprep.subr.mxu0 0.0
    %718 = vmatpush1.msra.mxu0 %v214
    %719 = vmatprep.subr.mxu0 0.0
    %720 = vmatpush1.msra.mxu0 %v213
    %721 = vmatprep.subr.mxu0 0.0
    %722 = vmatpush1.msra.mxu0 %v212
    %723 = vmatprep.subr.mxu0 0.0
    %724 = vmatpush2.msra.mxu0 0.0
    %725 = vmatprep.subr.mxu0 0.0
    %726 = vmatpush2.msra.mxu0 0.0
    %727 = vmatprep.subr.mxu0 0.0
    %728 = vmatpush2.msra.mxu0 0.0
    %729 = vmatprep.subr.mxu0 0.0
    %730 = vmatpush2.msra.mxu0 0.0
    %731 = vmatprep.subr.mxu0 0.0
    %732 = vmatpush2.msra.mxu0 0.0
    %733 = vmatprep.subr.mxu0 0.0
    %734 = vmatpush2.msra.mxu0 0.0
    %735 = vmatprep.subr.mxu0 0.0
    %736 = vmatpush2.msra.mxu0 0.0
    %737 = vmatprep.subr.mxu0 0.0
    %738 = vmatpush2.msra.mxu0 0.0
    %739 = vmatprep.subr.mxu0 0.0
    %740 = vmatpush2.msra.mxu0 0.0
    %741 = vmatprep.subr.mxu0 0.0
    %742 = vmatpush2.msra.mxu0 0.0
    %743 = vmatprep.subr.mxu0 0.0
    %744 = vmatpush2.msra.mxu0 0.0
    %745 = vmatprep.subr.mxu0 0.0
    %746 = vmatpush2.msra.mxu0 0.0
    %747 = vmatprep.subr.mxu0 0.0
    %748 = vmatpush2.msra.mxu0 0.0
    %749 = vmatprep.subr.mxu0 0.0
    %750 = vmatpush2.msra.mxu0 0.0
    %751 = vmatprep.subr.mxu0 0.0
    %752 = vmatpush2.msra.mxu0 0.0
    %753 = vmatprep.subr.mxu0 0.0
    %754 = vmatpush2.msra.mxu0 0.0
    %755 = vmatprep.mubr.f32.mxu0 0.0
    %756 = vmatmul.mubr.f32.gmra.mxu0 %v689
    %v757 = vpop.f32.mrf.mxu0
    %v758 = vadd.f32 %v687, %v757
    %v759 = vpop.f32.mrf.mxu0
    %760 = vdwg.mxu0
    %v761 = vtanh.pop %v758
    %s762 = scalar_lea.vmem [#allocation3], 48
    %763 = vst.msk [vmem:[%s762] sm:$0xff] %vm189, %v761
    %s764 = scalar_lea.vmem [#allocation2], 56
    %v765 = vld [vmem:[%s764] sm:$0xff]
    %v767 = vsel %vm189, %v761, 0
    %769 = vmatprep.subr.mxu0 0.0
    %770 = vmatpush1.msra.mxu0 0.0
    %771 = vmatprep.subr.mxu0 0.0
    %772 = vmatpush1.msra.mxu0 0.0
    %773 = vmatprep.subr.mxu0 0.0
    %774 = vmatpush1.msra.mxu0 0.0
    %775 = vmatprep.subr.mxu0 0.0
    %776 = vmatpush1.msra.mxu0 0.0
    %777 = vmatprep.subr.mxu0 0.0
    %778 = vmatpush1.msra.mxu0 0.0
    %779 = vmatprep.subr.mxu0 0.0
    %780 = vmatpush1.msra.mxu0 0.0
    %781 = vmatprep.subr.mxu0 0.0
    %782 = vmatpush1.msra.mxu0 0.0
    %783 = vmatprep.subr.mxu0 0.0
    %784 = vmatpush1.msra.mxu0 0.0
    %785 = vmatprep.subr.mxu0 0.0
    %786 = vmatpush1.msra.mxu0 %v219
    %787 = vmatprep.subr.mxu0 0.0
    %788 = vmatpush1.msra.mxu0 %v218
    %789 = vmatprep.subr.mxu0 0.0
    %790 = vmatpush1.msra.mxu0 %v217
    %791 = vmatprep.subr.mxu0 0.0
    %792 = vmatpush1.msra.mxu0 %v216
    %793 = vmatprep.subr.mxu0 0.0
    %794 = vmatpush1.msra.mxu0 %v215
    %795 = vmatprep.subr.mxu0 0.0
    %796 = vmatpush1.msra.mxu0 %v214
    %797 = vmatprep.subr.mxu0 0.0
    %798 = vmatpush1.msra.mxu0 %v213
    %799 = vmatprep.subr.mxu0 0.0
    %800 = vmatpush1.msra.mxu0 %v212
    %801 = vmatprep.subr.mxu0 0.0
    %802 = vmatpush2.msra.mxu0 0.0
    %803 = vmatprep.subr.mxu0 0.0
    %804 = vmatpush2.msra.mxu0 0.0
    %805 = vmatprep.subr.mxu0 0.0
    %806 = vmatpush2.msra.mxu0 0.0
    %807 = vmatprep.subr.mxu0 0.0
    %808 = vmatpush2.msra.mxu0 0.0
    %809 = vmatprep.subr.mxu0 0.0
    %810 = vmatpush2.msra.mxu0 0.0
    %811 = vmatprep.subr.mxu0 0.0
    %812 = vmatpush2.msra.mxu0 0.0
    %813 = vmatprep.subr.mxu0 0.0
    %814 = vmatpush2.msra.mxu0 0.0
    %815 = vmatprep.subr.mxu0 0.0
    %816 = vmatpush2.msra.mxu0 0.0
    %817 = vmatprep.subr.mxu0 0.0
    %818 = vmatpush2.msra.mxu0 0.0
    %819 = vmatprep.subr.mxu0 0.0
    %820 = vmatpush2.msra.mxu0 0.0
    %821 = vmatprep.subr.mxu0 0.0
    %822 = vmatpush2.msra.mxu0 0.0
    %823 = vmatprep.subr.mxu0 0.0
    %824 = vmatpush2.msra.mxu0 0.0
    %825 = vmatprep.subr.mxu0 0.0
    %826 = vmatpush2.msra.mxu0 0.0
    %827 = vmatprep.subr.mxu0 0.0
    %828 = vmatpush2.msra.mxu0 0.0
    %829 = vmatprep.subr.mxu0 0.0
    %830 = vmatpush2.msra.mxu0 0.0
    %831 = vmatprep.subr.mxu0 0.0
    %832 = vmatpush2.msra.mxu0 0.0
    %833 = vmatprep.mubr.f32.mxu0 0.0
    %834 = vmatmul.mubr.f32.gmra.mxu0 %v767
    %v835 = vpop.f32.mrf.mxu0
    %v836 = vadd.f32 %v765, %v835
    %v837 = vpop.f32.mrf.mxu0
    %838 = vdwg.mxu0
    %v839 = vtanh.pop %v836
    %s840 = scalar_lea.vmem [#allocation3], 56
    %841 = vst.msk [vmem:[%s840] sm:$0xff] %vm189, %v839
    %s842 = scalar_lea.vmem [#allocation2], 64
    %v843 = vld [vmem:[%s842] sm:$0xff]
    %v845 = vsel %vm189, %v839, 0
    %847 = vmatprep.subr.mxu0 0.0
    %848 = vmatpush1.msra.mxu0 0.0
    %849 = vmatprep.subr.mxu0 0.0
    %850 = vmatpush1.msra.mxu0 0.0
    %851 = vmatprep.subr.mxu0 0.0
    %852 = vmatpush1.msra.mxu0 0.0
    %853 = vmatprep.subr.mxu0 0.0
    %854 = vmatpush1.msra.mxu0 0.0
    %855 = vmatprep.subr.mxu0 0.0
    %856 = vmatpush1.msra.mxu0 0.0
    %857 = vmatprep.subr.mxu0 0.0
    %858 = vmatpush1.msra.mxu0 0.0
    %859 = vmatprep.subr.mxu0 0.0
    %860 = vmatpush1.msra.mxu0 0.0
    %861 = vmatprep.subr.mxu0 0.0
    %862 = vmatpush1.msra.mxu0 0.0
    %863 = vmatprep.subr.mxu0 0.0
    %864 = vmatpush1.msra.mxu0 %v219
    %865 = vmatprep.subr.mxu0 0.0
    %866 = vmatpush1.msra.mxu0 %v218
    %867 = vmatprep.subr.mxu0 0.0
    %868 = vmatpush1.msra.mxu0 %v217
    %869 = vmatprep.subr.mxu0 0.0
    %870 = vmatpush1.msra.mxu0 %v216
    %871 = vmatprep.subr.mxu0 0.0
    %872 = vmatpush1.msra.mxu0 %v215
    %873 = vmatprep.subr.mxu0 0.0
    %874 = vmatpush1.msra.mxu0 %v214
    %875 = vmatprep.subr.mxu0 0.0
    %876 = vmatpush1.msra.mxu0 %v213
    %877 = vmatprep.subr.mxu0 0.0
    %878 = vmatpush1.msra.mxu0 %v212
    %879 = vmatprep.subr.mxu0 0.0
    %880 = vmatpush2.msra.mxu0 0.0
    %881 = vmatprep.subr.mxu0 0.0
    %882 = vmatpush2.msra.mxu0 0.0
    %883 = vmatprep.subr.mxu0 0.0
    %884 = vmatpush2.msra.mxu0 0.0
    %885 = vmatprep.subr.mxu0 0.0
    %886 = vmatpush2.msra.mxu0 0.0
    %887 = vmatprep.subr.mxu0 0.0
    %888 = vmatpush2.msra.mxu0 0.0
    %889 = vmatprep.subr.mxu0 0.0
    %890 = vmatpush2.msra.mxu0 0.0
    %891 = vmatprep.subr.mxu0 0.0
    %892 = vmatpush2.msra.mxu0 0.0
    %893 = vmatprep.subr.mxu0 0.0
    %894 = vmatpush2.msra.mxu0 0.0
    %895 = vmatprep.subr.mxu0 0.0
    %896 = vmatpush2.msra.mxu0 0.0
    %897 = vmatprep.subr.mxu0 0.0
    %898 = vmatpush2.msra.mxu0 0.0
    %899 = vmatprep.subr.mxu0 0.0
    %900 = vmatpush2.msra.mxu0 0.0
    %901 = vmatprep.subr.mxu0 0.0
    %902 = vmatpush2.msra.mxu0 0.0
    %903 = vmatprep.subr.mxu0 0.0
    %904 = vmatpush2.msra.mxu0 0.0
    %905 = vmatprep.subr.mxu0 0.0
    %906 = vmatpush2.msra.mxu0 0.0
    %907 = vmatprep.subr.mxu0 0.0
    %908 = vmatpush2.msra.mxu0 0.0
    %909 = vmatprep.subr.mxu0 0.0
    %910 = vmatpush2.msra.mxu0 0.0
    %911 = vmatprep.mubr.f32.mxu0 0.0
    %912 = vmatmul.mubr.f32.gmra.mxu0 %v845
    %v913 = vpop.f32.mrf.mxu0
    %v914 = vadd.f32 %v843, %v913
    %v915 = vpop.f32.mrf.mxu0
    %916 = vdwg.mxu0
    %v917 = vtanh.pop %v914
    %s918 = scalar_lea.vmem [#allocation3], 64
    %919 = vst.msk [vmem:[%s918] sm:$0xff] %vm189, %v917
    %v920 = vld [vmem:[#allocation3 + $0x8] sm:$0xff]
    %v921 = vld [vmem:[#allocation3 + $0x10] sm:$0xff]
    %v922 = vld [vmem:[#allocation3 + $0x18] sm:$0xff]
    %v923 = vld [vmem:[#allocation3 + $0x20] sm:$0xff]
    %v924 = vld [vmem:[#allocation3 + $0x28] sm:$0xff]
    %v925 = vld [vmem:[#allocation3 + $0x30] sm:$0xff]
    %v926 = vld [vmem:[#allocation3 + $0x38] sm:$0xff]
    %v927 = vld [vmem:[#allocation3 + $0x40] sm:$0xff]
    %v928 = vld [vmem:[#allocation4] sm:$0xff]
    %v929 = vld [vmem:[#allocation4 + $0x8] sm:$0xff]
    %v930 = vld [vmem:[#allocation4 + $0x10] sm:$0xff]
    %v931 = vld [vmem:[#allocation4 + $0x18] sm:$0xff]
    %v932 = vld [vmem:[#allocation4 + $0x20] sm:$0xff]
    %v933 = vld [vmem:[#allocation4 + $0x28] sm:$0xff]
    %v934 = vld [vmem:[#allocation4 + $0x30] sm:$0xff]
    %v935 = vld [vmem:[#allocation4 + $0x38] sm:$0xff]
    %v936 = vld [vmem:[%s6] sm:$0x1]
    %v938 = vlaneseq
    %v939 = vshrl.u32 %v938, 7
    %v940 = vsub.s32 0, %v939
    %v941 = vrot.slane %v936, %v940
    %v944 = vsel %vm189, %v920, 0
    %v947 = vsel %vm189, %v921, 0
    %v950 = vsel %vm189, %v922, 0
    %v953 = vsel %vm189, %v923, 0
    %v956 = vsel %vm189, %v924, 0
    %v959 = vsel %vm189, %v925, 0
    %v962 = vsel %vm189, %v926, 0
    %v965 = vsel %vm189, %v927, 0
    %967 = vmatprep.subr.mxu0 0.0
    %968 = vmatpush1.msra.mxu0 0.0
    %969 = vmatprep.subr.mxu0 0.0
    %970 = vmatpush1.msra.mxu0 0.0
    %971 = vmatprep.subr.mxu0 0.0
    %972 = vmatpush1.msra.mxu0 0.0
    %973 = vmatprep.subr.mxu0 0.0
    %974 = vmatpush1.msra.mxu0 0.0
    %975 = vmatprep.subr.mxu0 0.0
    %976 = vmatpush1.msra.mxu0 0.0
    %977 = vmatprep.subr.mxu0 0.0
    %978 = vmatpush1.msra.mxu0 0.0
    %979 = vmatprep.subr.mxu0 0.0
    %980 = vmatpush1.msra.mxu0 0.0
    %981 = vmatprep.subr.mxu0 0.0
    %982 = vmatpush1.msra.mxu0 0.0
    %983 = vmatprep.subr.mxu0 0.0
    %984 = vmatpush1.msra.mxu0 %v935
    %985 = vmatprep.subr.mxu0 0.0
    %986 = vmatpush1.msra.mxu0 %v934
    %987 = vmatprep.subr.mxu0 0.0
    %988 = vmatpush1.msra.mxu0 %v933
    %989 = vmatprep.subr.mxu0 0.0
    %990 = vmatpush1.msra.mxu0 %v932
    %991 = vmatprep.subr.mxu0 0.0
    %992 = vmatpush1.msra.mxu0 %v931
    %993 = vmatprep.subr.mxu0 0.0
    %994 = vmatpush1.msra.mxu0 %v930
    %995 = vmatprep.subr.mxu0 0.0
    %996 = vmatpush1.msra.mxu0 %v929
    %997 = vmatprep.subr.mxu0 0.0
    %998 = vmatpush1.msra.mxu0 %v928
    %999 = vmatprep.subr.mxu0 0.0
    %1000 = vmatpush2.msra.mxu0 0.0
    %1001 = vmatprep.subr.mxu0 0.0
    %1002 = vmatpush2.msra.mxu0 0.0
    %1003 = vmatprep.subr.mxu0 0.0
    %1004 = vmatpush2.msra.mxu0 0.0
    %1005 = vmatprep.subr.mxu0 0.0
    %1006 = vmatpush2.msra.mxu0 0.0
    %1007 = vmatprep.subr.mxu0 0.0
    %1008 = vmatpush2.msra.mxu0 0.0
    %1009 = vmatprep.subr.mxu0 0.0
    %1010 = vmatpush2.msra.mxu0 0.0
    %1011 = vmatprep.subr.mxu0 0.0
    %1012 = vmatpush2.msra.mxu0 0.0
    %1013 = vmatprep.subr.mxu0 0.0
    %1014 = vmatpush2.msra.mxu0 0.0
    %1015 = vmatprep.subr.mxu0 0.0
    %1016 = vmatpush2.msra.mxu0 0.0
    %1017 = vmatprep.subr.mxu0 0.0
    %1018 = vmatpush2.msra.mxu0 0.0
    %1019 = vmatprep.subr.mxu0 0.0
    %1020 = vmatpush2.msra.mxu0 0.0
    %1021 = vmatprep.subr.mxu0 0.0
    %1022 = vmatpush2.msra.mxu0 0.0
    %1023 = vmatprep.subr.mxu0 0.0
    %1024 = vmatpush2.msra.mxu0 0.0
    %1025 = vmatprep.subr.mxu0 0.0
    %1026 = vmatpush2.msra.mxu0 0.0
    %1027 = vmatprep.subr.mxu0 0.0
    %1028 = vmatpush2.msra.mxu0 0.0
    %1029 = vmatprep.subr.mxu0 0.0
    %1030 = vmatpush2.msra.mxu0 0.0
    %1031 = vmatprep.mubr.f32.mxu0 0.0
    %1032 = vmatmul.mubr.f32.gmra.mxu0 %v944
    %v1033 = vpop.f32.mrf.mxu0
    %v1034 = vadd.f32 %v941, %v1033
    %v1035 = vpop.f32.mrf.mxu0
    %1036 = vmatprep.mubr.f32.mxu0 0.0
    %1037 = vmatmul.mubr.f32.gmra.mxu0 %v947
    %v1038 = vpop.f32.mrf.mxu0
    %v1039 = vadd.f32 %v941, %v1038
    %v1040 = vpop.f32.mrf.mxu0
    %1041 = vmatprep.mubr.f32.mxu0 0.0
    %1042 = vmatmul.mubr.f32.gmra.mxu0 %v950
    %v1043 = vpop.f32.mrf.mxu0
    %v1044 = vadd.f32 %v941, %v1043
    %v1045 = vpop.f32.mrf.mxu0
    %1046 = vmatprep.mubr.f32.mxu0 0.0
    %1047 = vmatmul.mubr.f32.gmra.mxu0 %v953
    %v1048 = vpop.f32.mrf.mxu0
    %v1049 = vadd.f32 %v941, %v1048
    %v1050 = vpop.f32.mrf.mxu0
    %1051 = vmatprep.mubr.f32.mxu0 0.0
    %1052 = vmatmul.mubr.f32.gmra.mxu0 %v956
    %v1053 = vpop.f32.mrf.mxu0
    %v1054 = vadd.f32 %v941, %v1053
    %v1055 = vpop.f32.mrf.mxu0
    %1056 = vmatprep.mubr.f32.mxu0 0.0
    %1057 = vmatmul.mubr.f32.gmra.mxu0 %v959
    %v1058 = vpop.f32.mrf.mxu0
    %v1059 = vadd.f32 %v941, %v1058
    %v1060 = vpop.f32.mrf.mxu0
    %1061 = vmatprep.mubr.f32.mxu0 0.0
    %1062 = vmatmul.mubr.f32.gmra.mxu0 %v962
    %v1063 = vpop.f32.mrf.mxu0
    %v1064 = vadd.f32 %v941, %v1063
    %v1065 = vpop.f32.mrf.mxu0
    %1066 = vmatprep.mubr.f32.mxu0 0.0
    %1067 = vmatmul.mubr.f32.gmra.mxu0 %v965
    %v1068 = vpop.f32.mrf.mxu0
    %v1069 = vadd.f32 %v941, %v1068
    %v1070 = vpop.f32.mrf.mxu0
    %1071 = vdwg.mxu0
    %1072 = vst [vmem:[#allocation7] sm:$0xff] %v1034
    %1073 = vst [vmem:[#allocation7 + $0x8] sm:$0xff] %v1039
    %1074 = vst [vmem:[#allocation7 + $0x10] sm:$0xff] %v1044
    %1075 = vst [vmem:[#allocation7 + $0x18] sm:$0xff] %v1049
    %1076 = vst [vmem:[#allocation7 + $0x20] sm:$0xff] %v1054
    %1077 = vst [vmem:[#allocation7 + $0x28] sm:$0xff] %v1059
    %1078 = vst [vmem:[#allocation7 + $0x30] sm:$0xff] %v1064
    %1079 = vst [vmem:[#allocation7 + $0x38] sm:$0xff] %v1069
    // Predicated region
    $region34: #{tpu_custom_call.1} parent=1 // pred_check
      _
    $region35: #{tpu_custom_call.1} parent=1 // pred_check_branch
      %1081 = sbr.rel (0) target = $region37
    $region36: #{tpu_custom_call.1} parent=1 // pred_region
      %s1083 = ssub.s32 1024, 1024
      %1084 = vsyncadd [#allocation6], %s1083
      %s1085 = sshll.u32 [#allocation7], 4
      %s1086 = int_to_ptr.vmem [resolvable:$true] %s1085
      %1091 = dma.vmem_to_hbm [thread:$0]  %s1086, 1024, %s7, [#allocation6], 128, 128, 8
    $region37: #{tpu_custom_call.1} parent=1 // pred_fallthru
      _
    // Predicated region
    $region38: #{tpu_custom_call.1} parent=1 // pred_check
      _
    $region39: #{tpu_custom_call.1} parent=1 // pred_check_branch
      %1093 = sbr.rel (0) target = $region41
    $region40: #{tpu_custom_call.1} parent=1 // pred_region
      %1094 = dma.done [#allocation6], 1024
    $region41: #{tpu_custom_call.1} parent=1 // pred_fallthru
      _
    %1095 = vsyncpa [#allocation5], 1
    %1096 = vsyncpa [#allocation6], 1

</llo_original>
